<compile_context>
chip_gen: v7x
topology: tpu7x:2x2x1
jax: 0.10.0
libtpu: 0.0.40
codegen_flags: <defaults>
</compile_context>

<pallas_src>
import functools
import math

import jax
import jax.numpy as jnp
from jax import lax
from jax.experimental import pallas as pl
from jax.experimental.pallas import tpu as pltpu


def _round_up(x, m):
    return ((x + m - 1) // m) * m


def _vmem_capacity_bytes():
    """Query per-core VMEM capacity; fall back to the v7x minimum (64 MiB)."""
    try:
        info = pltpu.get_tpu_info()
        cap = getattr(info, "vmem_capacity_bytes", None)
        if cap:
            return int(cap)
    except Exception:
        pass
    return 64 * 1024 * 1024


def _choose_hw_tile(hw, w, halo_blk, per_lane_bytes, vmem_cap):
    """Pick the flat-HW tile size.

    Preferred candidates are proper divisors of HW that are multiples of both W
    (tile-invariant column masks) and HALO_BLK (halo blocks align with tile
    boundaries); among those that fit the per-tile VMEM budget the largest is
    chosen (fewer grid steps), but HW itself is excluded so T >= 2 whenever
    possible (keeps megacore sharding even for B == 1).  Falls back to a single
    whole-image tile when no candidate exists (e.g. lcm(W, 128) does not divide
    HW); that case only exercises the t == 0 (zero halo) path.
    """
    budget_bytes = max(min(vmem_cap // 8, 4 * 1024 * 1024), 512 * 1024)
    budget_lanes = max(budget_bytes // per_lane_bytes, 128)
    step = halo_blk // math.gcd(halo_blk, w) * w          # lcm(halo_blk, w)
    cands = [d for d in range(step, hw, step) if hw % d == 0]
    fitting = [d for d in cands if d <= budget_lanes]
    if fitting:
        return max(fitting)
    if cands:
        return min(cands)
    return hw


def _mcf_affine_kernel(xc_ref, xp_ref, wf_ref, bc_ref, wl_ref, bl_ref, cm_ref,
                       out_ref, ld_ref, xcat_ref, col_ref,
                       *, taps, thw, halo_blk, c, fuse_1x1, approx_recip,
                       precision):
    """One (batch, HW-tile) grid step.

    xc_ref : (1, C, THW)          current flat-HW tile of x
    xp_ref : (1, C, HALO_BLK)     causal halo: last HALO_BLK positions before the
                                  tile start (garbage at t == 0, zeroed in-kernel)
    wf_ref : (Chid, kH*kW*C)      folded masked-conv weight (im2col layout)
    bc_ref : (Chid, 1)            masked-conv bias
    wl_ref/bl_ref : (2C, Chid)/(2C, 1)  1x1-conv weight/bias ([mu | log_scale] rows)
    cm_ref : (kW, 1, THW)         column-validity masks (one per kernel column offset)
    out_ref: (1, C, THW)          flow output tile
    ld_ref : (1, 1, 1, 1)         partial logdet (sum over this tile)
    xcat_ref: (C, HALO_BLK+THW)   VMEM staging slab [ halo | current tile ]
    col_ref : (kH*kW*C, THW)      VMEM im2col slab (one (C, THW) window per tap)
    """
    x_curr = xc_ref[0]                                   # (C, THW)

    # Stage [halo | current] in VMEM.  At t == 0 the halo is the zero padding
    # above the image; otherwise it is the trailing HALO_BLK flat positions of
    # the previous tile, delivered directly by xp_ref's halo-sized block.
    @pl.when(pl.program_id(1) == 0)
    def _():
        xcat_ref[:, 0:halo_blk] = jnp.zeros((c, halo_blk), x_curr.dtype)

    @pl.when(pl.program_id(1) > 0)
    def _():
        xcat_ref[:, 0:halo_blk] = xp_ref[0]

    xcat_ref[:, halo_blk:] = x_curr

    # ---- masked (order 'A') conv as a single deep-K matmul ----
    # Build the im2col slab: one shifted (and column-masked) window per tap,
    # stacked on the sublane axis, then contract against the folded weight.
    for ti, (s, kwi, need_mask) in enumerate(taps):
        x_tap = xcat_ref[:, pl.ds(halo_blk - s, thw)]     # (C, THW), static offset
        if need_mask:
            # zero positions whose source column fell off the image (the flat
            # shift would otherwise wrap into a neighbouring row)
            x_tap = x_tap * cm_ref[kwi]
        col_ref[ti * c:(ti + 1) * c, :] = x_tap

    hidden = jnp.dot(wf_ref[...], col_ref[...],
                     preferred_element_type=jnp.float32, precision=precision)
    hidden = jnp.maximum(hidden + bc_ref[...], 0.0)       # ReLU, (Chid, THW)

    # ---- 1x1 conv -> mu, log_scale ----
    if fuse_1x1:
        # Single MXU pass over hidden; the [mu | log_scale] split is a cheap
        # sublane slice (C % 8 == 0), not a lane slice.
        params = jnp.dot(wl_ref[...], hidden, preferred_element_type=jnp.float32,
                         precision=precision) + bl_ref[...]          # (2C, THW)
        mu = params[:c]
        z = params[c:] + 2.0
    else:
        mu = jnp.dot(wl_ref[0:c, :], hidden, preferred_element_type=jnp.float32,
                     precision=precision) + bl_ref[0:c, :]
        z = jnp.dot(wl_ref[c:2 * c, :], hidden, preferred_element_type=jnp.float32,
                    precision=precision) + bl_ref[c:2 * c, :] + 2.0

    # scale = sigmoid(z) and log(scale), sharing transcendentals:
    #   e = exp(-|z|); scale = 1/(1+e) if z>=0 else e/(1+e);
    #   log(sigmoid(z)) = min(z, 0) - log(1 + e)   (numerically stable)
    e = jnp.exp(-jnp.abs(z))
    d = 1.0 + e
    if approx_recip:
        inv = pl.reciprocal(d, approx=True)               # EUP slot, ~free
    else:
        inv = 1.0 / d
    scale = jnp.where(z >= 0, inv, e * inv)
    log_scale = jnp.minimum(z, 0.0) - jnp.log(d)

    out_ref[0] = (scale * x_curr + mu).astype(out_ref.dtype)
    ld_ref[...] = jnp.sum(log_scale).reshape(1, 1, 1, 1)


def masked_conv_flow_forward(x_nchw, conv_w, conv_b, lin_w, lin_b, kernel_size,
                             precision=lax.Precision.DEFAULT, hw_tile=None):
    """MaskedConvFlow.forward(x, reverse=False) -> (out [B,C,H,W], logdet [B])."""
    B, C, H, W = x_nchw.shape
    kH, kW = kernel_size
    cW = kW // 2
    Chid = conv_w.shape[0]
    Cout = lin_w.shape[0]
    assert Cout == 2 * C, "affine transform expects 2*C output channels"

    HW = H * W
    halo = kH * W + cW                       # furthest backward flat reach of a tap
    HALO_BLK = _round_up(halo, 128)          # halo rounded up to a lane-aligned block

    vmem_cap = _vmem_capacity_bytes()
    # f32 bytes live per lane-position of a tile (x/out blocks double-buffered,
    # plus the im2col slab, the staging slab and the Chid-sized intermediates).
    per_lane_bytes = 4 * (2 * 2 * C + kH * kW * C + C + Chid + 2 * C)

    THW = hw_tile if hw_tile is not None else _choose_hw_tile(
        HW, W, HALO_BLK, per_lane_bytes, vmem_cap)
    assert HW % THW == 0
    T = HW // THW
    if T > 1:
        assert THW % HALO_BLK == 0 and THW % W == 0

    # NCHW kept as-is: channels on sublanes, flattened H*W on the (dense) lane axis.
    x_flat = x_nchw.reshape(B, C, HW)

    # --- parameter packing (PyTorch layouts -> kernel layouts); no heavy compute ---
    # Folded im2col weight: column block ti = kh*kW + kw holds conv_w[:, :, kh, kw].
    w_fold = jnp.transpose(conv_w, (0, 2, 3, 1)).reshape(Chid, kH * kW * C)
    b_conv = conv_b.reshape(Chid, 1)
    w_lin = lin_w.reshape(Cout, Chid)
    b_lin = lin_b.reshape(Cout, 1)

    # Column-validity masks, one per kernel column offset; tile-invariant because
    # THW % W == 0 whenever T > 1 (single tile always starts at column 0).
    cols = jnp.arange(THW, dtype=jnp.int32) % W
    colmask = jnp.stack(
        [((cols + (kw - cW) >= 0) & (cols + (kw - cW) < W)).astype(x_flat.dtype)
         for kw in range(kW)], axis=0).reshape(kW, 1, THW)

    # Static per-tap metadata: (backward flat shift, column-mask index, needs mask).
    taps = tuple(((kH - kh) * W - (kw - cW), kw, kw != cW)
                 for kh in range(kH) for kw in range(kW))

    fuse_1x1 = (C % 8 == 0)
    approx_recip = precision is not lax.Precision.HIGHEST

    kernel = functools.partial(
        _mcf_affine_kernel, taps=taps, thw=THW, halo_blk=HALO_BLK, c=C,
        fuse_1x1=fuse_1x1, approx_recip=approx_recip, precision=precision)

    hpt = max(THW // HALO_BLK, 1)            # halo blocks per tile

    cost = pl.CostEstimate(
        flops=2 * B * HW * Chid * (kH * kW * C + 2 * C),
        transcendentals=3 * B * C * HW,
        bytes_accessed=4 * (2 * B * C * HW + B * C * HALO_BLK * T
                            + Chid * kH * kW * C + 2 * C * Chid + kW * THW))

    out_flat, logdet_part = pl.pallas_call(
        kernel,
        out_shape=(jax.ShapeDtypeStruct((B, C, HW), x_nchw.dtype),
                   jax.ShapeDtypeStruct((B, T, 1, 1), jnp.float32)),
        grid_spec=pltpu.PrefetchScalarGridSpec(
            num_scalar_prefetch=0,
            grid=(B, T),
            in_specs=[
                # current HW tile of x
                pl.BlockSpec((1, C, THW), lambda b, t: (b, 0, t)),
                # causal halo: the HALO_BLK flat positions just before the tile
                # start (clamped at t == 0 and zeroed in-kernel)
                pl.BlockSpec((1, C, HALO_BLK),
                             lambda b, t: (b, 0, jnp.maximum(t * hpt - 1, 0))),
                # weights / biases / masks: constant index maps (re-DMA is skipped
                # when the block index is unchanged between consecutive steps)
                pl.BlockSpec((Chid, kH * kW * C), lambda b, t: (0, 0)),
                pl.BlockSpec((Chid, 1), lambda b, t: (0, 0)),
                pl.BlockSpec((Cout, Chid), lambda b, t: (0, 0)),
                pl.BlockSpec((Cout, 1), lambda b, t: (0, 0)),
                pl.BlockSpec((kW, 1, THW), lambda b, t: (0, 0, 0)),
            ],
            out_specs=(
                pl.BlockSpec((1, C, THW), lambda b, t: (b, 0, t)),
                pl.BlockSpec((1, 1, 1, 1), lambda b, t: (b, t, 0, 0)),
            ),
            scratch_shapes=[
                pltpu.VMEM((C, HALO_BLK + THW), x_nchw.dtype),     # [halo|curr] slab
                pltpu.VMEM((kH * kW * C, THW), x_nchw.dtype),      # im2col slab
            ]),
        compiler_params=pltpu.CompilerParams(
            dimension_semantics=("parallel", "parallel"),
            vmem_limit_bytes=min(vmem_cap * 3 // 4, 100 * 1024 * 1024)),
        cost_estimate=cost,
    )(x_flat, x_flat, w_fold, b_conv, w_lin, b_lin, colmask)

    out = out_flat.reshape(B, C, H, W)
    logdet = jnp.sum(logdet_part.reshape(B, T), axis=1)
    return out, logdet


def reference_forward(x_nchw, conv_w, conv_b, lin_w, lin_b, kernel_size):
    """Pure-JAX reference (lax.conv) for correctness checking."""
    B, C, H, W = x_nchw.shape
    kH, kW = kernel_size
    cW = kW // 2
    xpad = jnp.pad(x_nchw, ((0, 0), (0, 0), (kH, 0), (cW, cW)))
    hidden = lax.conv_general_dilated(
        xpad, conv_w, window_strides=(1, 1), padding='VALID',
        dimension_numbers=('NCHW', 'OIHW', 'NCHW'),
        precision=lax.Precision.HIGHEST)
    hidden = hidden[:, :, :H, :] + conv_b[None, :, None, None]
    hidden = jnp.maximum(hidden, 0.0)
    params = lax.conv_general_dilated(
        hidden, lin_w, window_strides=(1, 1), padding='VALID',
        dimension_numbers=('NCHW', 'OIHW', 'NCHW'),
        precision=lax.Precision.HIGHEST) + lin_b[None, :, None, None]
    mu, log_scale = jnp.split(params, 2, axis=1)
    scale = jax.nn.sigmoid(log_scale + 2.0)
    out = scale * x_nchw + mu
    logdet = jnp.sum(jnp.log(scale).reshape(B, -1), axis=1)
    return out, logdet


if __name__ == "__main__":
    B, C, H, W = 2, 4, 16, 16
    kernel_size = (2, 3)
    hidden_channels = 4 * C          # macow2 default for in_channels <= 96
    out_channels = 2 * C             # affine transform -> [mu | log_scale]

    key = jax.random.PRNGKey(0)
    kx, k1, k2, k3, k4 = jax.random.split(key, 5)
    x = jax.random.normal(kx, (B, C, H, W), dtype=jnp.float32)
    # Deterministic synthetic parameters in PyTorch layouts.
    conv_w = 0.1 * jax.random.normal(k1, (hidden_channels, C) + kernel_size, jnp.float32)
    conv_b = 0.1 * jax.random.normal(k2, (hidden_channels,), jnp.float32)
    lin_w = 0.1 * jax.random.normal(k3, (out_channels, hidden_channels, 1, 1), jnp.float32)
    lin_b = 0.1 * jax.random.normal(k4, (out_channels,), jnp.float32)

    ref_out, ref_logdet = reference_forward(x, conv_w, conv_b, lin_w, lin_b, kernel_size)

    # Production default: DEFAULT matmul precision + approx EUP reciprocal.
    # Auto tiling picks THW=128 (T=2), exercising the halo-block DMA path.
    out, logdet = masked_conv_flow_forward(x, conv_w, conv_b, lin_w, lin_b, kernel_size)
    jax.block_until_ready((out, logdet))
    assert out.shape == (B, C, H, W) and logdet.shape == (B,)
    assert jnp.allclose(out, ref_out, atol=1e-2, rtol=1e-2)
    assert jnp.allclose(logdet, ref_logdet, atol=1e-2, rtol=1e-2)

    # Strict f32 check: HIGHEST precision + exact reciprocal on the same tiling.
    out_hi, logdet_hi = masked_conv_flow_forward(
        x, conv_w, conv_b, lin_w, lin_b, kernel_size,
        precision=lax.Precision.HIGHEST)
    jax.block_until_ready((out_hi, logdet_hi))
    assert jnp.allclose(out_hi, ref_out, atol=1e-3, rtol=1e-3)
    assert jnp.allclose(logdet_hi, ref_logdet, atol=1e-3, rtol=1e-3)

    print("KERNEL_OK")
</pallas_src>

<mosaic_0001>
module attributes {stable_mosaic.version = 11 : i64} {
  func.func @_mcf_affine_kernel(%arg0: i32, %arg1: i32, %arg2: memref<1x4x128xf32, #tpu.memory_space<vmem>>, %arg3: memref<1x4x128xf32, #tpu.memory_space<vmem>>, %arg4: memref<16x24xf32, #tpu.memory_space<vmem>>, %arg5: memref<16x1xf32, #tpu.memory_space<vmem>>, %arg6: memref<8x16xf32, #tpu.memory_space<vmem>>, %arg7: memref<8x1xf32, #tpu.memory_space<vmem>>, %arg8: memref<3x1x128xf32, #tpu.memory_space<vmem>>, %arg9: memref<1x4x128xf32, #tpu.memory_space<vmem>>, %arg10: memref<1x1x1x1xf32, #tpu.memory_space<vmem>>, %arg11: memref<4x256xf32, #tpu.memory_space<vmem>>, %arg12: memref<24x128xf32, #tpu.memory_space<vmem>>) attributes {dimension_semantics = [#tpu.dimension_semantics<parallel>, #tpu.dimension_semantics<parallel>], iteration_bounds = array<i64: 2, 2>, scalar_prefetch = 0 : i64, scratch_operands = 2 : i64, tpu.core_type = #tpu.core_type<tc>, window_params = [{transform_indices = @transform_0, window_bounds = array<i64: 1, 4, 128>}, {transform_indices = @transform_1, window_bounds = array<i64: 1, 4, 128>}, {pipeline_mode = #tpu.pipeline_mode<synchronous>, transform_indices = @transform_2, window_bounds = array<i64: 16, 24>}, {pipeline_mode = #tpu.pipeline_mode<synchronous>, transform_indices = @transform_3, window_bounds = array<i64: 16, 1>}, {pipeline_mode = #tpu.pipeline_mode<synchronous>, transform_indices = @transform_4, window_bounds = array<i64: 8, 16>}, {pipeline_mode = #tpu.pipeline_mode<synchronous>, transform_indices = @transform_5, window_bounds = array<i64: 8, 1>}, {pipeline_mode = #tpu.pipeline_mode<synchronous>, transform_indices = @transform_6, window_bounds = array<i64: 3, 1, 128>}, {transform_indices = @transform_7, window_bounds = array<i64: 1, 4, 128>}, {transform_indices = @transform_8, window_bounds = array<i64: 1, 1, 1, 1>}]} {
    %c0 = arith.constant 0 : index
    %c0_0 = arith.constant 0 : index
    %c0_1 = arith.constant 0 : index
    %0 = vector.load %arg2[%c0, %c0_0, %c0_1] : memref<1x4x128xf32, #tpu.memory_space<vmem>>, vector<1x4x128xf32>
    %1 = vector.shape_cast %0 : vector<1x4x128xf32> to vector<4x128xf32>
    %c0_i32 = arith.constant 0 : i32
    %2 = arith.cmpi eq, %arg1, %c0_i32 : i32
    %3 = arith.extui %2 : i1 to i32
    %c0_i32_2 = arith.constant 0 : i32
    %4 = arith.cmpi ne, %3, %c0_i32_2 : i32
    scf.if %4 {
      %cst_60 = arith.constant 0.000000e+00 : f32
      %83 = vector.broadcast %cst_60 : f32 to vector<4x128xf32>
      %c0_61 = arith.constant 0 : index
      %c0_62 = arith.constant 0 : index
      %84 = vector.load %arg11[%c0_61, %c0_62] : memref<4x256xf32, #tpu.memory_space<vmem>>, vector<4x128xf32>
      tpu.vector_store %arg11[%c0_61, %c0_62], %83 {strides = array<i32>} : memref<4x256xf32, #tpu.memory_space<vmem>>, vector<4x128xf32>,
    } else {
    }
    %c0_i32_3 = arith.constant 0 : i32
    %5 = arith.cmpi sgt, %arg1, %c0_i32_3 : i32
    %6 = arith.extui %5 : i1 to i32
    %c0_i32_4 = arith.constant 0 : i32
    %7 = arith.cmpi ne, %6, %c0_i32_4 : i32
    scf.if %7 {
      %c0_60 = arith.constant 0 : index
      %c0_61 = arith.constant 0 : index
      %c0_62 = arith.constant 0 : index
      %83 = vector.load %arg3[%c0_60, %c0_61, %c0_62] : memref<1x4x128xf32, #tpu.memory_space<vmem>>, vector<1x4x128xf32>
      %84 = vector.shape_cast %83 : vector<1x4x128xf32> to vector<4x128xf32>
      %c0_63 = arith.constant 0 : index
      %c0_64 = arith.constant 0 : index
      %85 = vector.load %arg11[%c0_63, %c0_64] : memref<4x256xf32, #tpu.memory_space<vmem>>, vector<4x128xf32>
      tpu.vector_store %arg11[%c0_63, %c0_64], %84 {strides = array<i32>} : memref<4x256xf32, #tpu.memory_space<vmem>>, vector<4x128xf32>,
    } else {
    }
    %c0_5 = arith.constant 0 : index
    %c128 = arith.constant 128 : index
    %8 = vector.load %arg11[%c0_5, %c128] : memref<4x256xf32, #tpu.memory_space<vmem>>, vector<4x128xf32>
    tpu.vector_store %arg11[%c0_5, %c128], %1 {strides = array<i32>} : memref<4x256xf32, #tpu.memory_space<vmem>>, vector<4x128xf32>,
    %c0_6 = arith.constant 0 : index
    %c95 = arith.constant 95 : index
    %9 = vector.load %arg11[%c0_6, %c95] : memref<4x256xf32, #tpu.memory_space<vmem>>, vector<4x128xf32>
    %c0_7 = arith.constant 0 : index
    %c0_8 = arith.constant 0 : index
    %c0_9 = arith.constant 0 : index
    %10 = vector.load %arg8[%c0_7, %c0_8, %c0_9] : memref<3x1x128xf32, #tpu.memory_space<vmem>>, vector<1x1x128xf32>
    %11 = vector.shape_cast %10 : vector<1x1x128xf32> to vector<1x128xf32>
    %12 = vector.broadcast %11 : vector<1x128xf32> to vector<4x128xf32>
    %13 = arith.mulf %9, %12 : vector<4x128xf32>
    %c0_10 = arith.constant 0 : index
    %c0_11 = arith.constant 0 : index
    %14 = vector.load %arg12[%c0_10, %c0_11] : memref<24x128xf32, #tpu.memory_space<vmem>>, vector<4x128xf32>
    tpu.vector_store %arg12[%c0_10, %c0_11], %13 {strides = array<i32>} : memref<24x128xf32, #tpu.memory_space<vmem>>, vector<4x128xf32>,
    %c0_12 = arith.constant 0 : index
    %c96 = arith.constant 96 : index
    %15 = vector.load %arg11[%c0_12, %c96] : memref<4x256xf32, #tpu.memory_space<vmem>>, vector<4x128xf32>
    %c4 = arith.constant 4 : index
    %c0_13 = arith.constant 0 : index
    %16 = vector.load %arg12[%c4, %c0_13] : memref<24x128xf32, #tpu.memory_space<vmem>>, vector<4x128xf32>
    tpu.vector_store %arg12[%c4, %c0_13], %15 {strides = array<i32>} : memref<24x128xf32, #tpu.memory_space<vmem>>, vector<4x128xf32>,
    %c0_14 = arith.constant 0 : index
    %c97 = arith.constant 97 : index
    %17 = vector.load %arg11[%c0_14, %c97] : memref<4x256xf32, #tpu.memory_space<vmem>>, vector<4x128xf32>
    %c2 = arith.constant 2 : index
    %c0_15 = arith.constant 0 : index
    %c0_16 = arith.constant 0 : index
    %18 = vector.load %arg8[%c2, %c0_15, %c0_16] : memref<3x1x128xf32, #tpu.memory_space<vmem>>, vector<1x1x128xf32>
    %19 = vector.shape_cast %18 : vector<1x1x128xf32> to vector<1x128xf32>
    %20 = vector.broadcast %19 : vector<1x128xf32> to vector<4x128xf32>
    %21 = arith.mulf %17, %20 : vector<4x128xf32>
    %c8 = arith.constant 8 : index
    %c0_17 = arith.constant 0 : index
    %22 = vector.load %arg12[%c8, %c0_17] : memref<24x128xf32, #tpu.memory_space<vmem>>, vector<4x128xf32>
    tpu.vector_store %arg12[%c8, %c0_17], %21 {strides = array<i32>} : memref<24x128xf32, #tpu.memory_space<vmem>>, vector<4x128xf32>,
    %c0_18 = arith.constant 0 : index
    %c111 = arith.constant 111 : index
    %23 = vector.load %arg11[%c0_18, %c111] : memref<4x256xf32, #tpu.memory_space<vmem>>, vector<4x128xf32>
    %c0_19 = arith.constant 0 : index
    %c0_20 = arith.constant 0 : index
    %c0_21 = arith.constant 0 : index
    %24 = vector.load %arg8[%c0_19, %c0_20, %c0_21] : memref<3x1x128xf32, #tpu.memory_space<vmem>>, vector<1x1x128xf32>
    %25 = vector.shape_cast %24 : vector<1x1x128xf32> to vector<1x128xf32>
    %26 = vector.broadcast %25 : vector<1x128xf32> to vector<4x128xf32>
    %27 = arith.mulf %23, %26 : vector<4x128xf32>
    %c12 = arith.constant 12 : index
    %c0_22 = arith.constant 0 : index
    %28 = vector.load %arg12[%c12, %c0_22] : memref<24x128xf32, #tpu.memory_space<vmem>>, vector<4x128xf32>
    tpu.vector_store %arg12[%c12, %c0_22], %27 {strides = array<i32>} : memref<24x128xf32, #tpu.memory_space<vmem>>, vector<4x128xf32>,
    %c0_23 = arith.constant 0 : index
    %c112 = arith.constant 112 : index
    %29 = vector.load %arg11[%c0_23, %c112] : memref<4x256xf32, #tpu.memory_space<vmem>>, vector<4x128xf32>
    %c16 = arith.constant 16 : index
    %c0_24 = arith.constant 0 : index
    %30 = vector.load %arg12[%c16, %c0_24] : memref<24x128xf32, #tpu.memory_space<vmem>>, vector<4x128xf32>
    tpu.vector_store %arg12[%c16, %c0_24], %29 {strides = array<i32>} : memref<24x128xf32, #tpu.memory_space<vmem>>, vector<4x128xf32>,
    %c0_25 = arith.constant 0 : index
    %c113 = arith.constant 113 : index
    %31 = vector.load %arg11[%c0_25, %c113] : memref<4x256xf32, #tpu.memory_space<vmem>>, vector<4x128xf32>
    %c2_26 = arith.constant 2 : index
    %c0_27 = arith.constant 0 : index
    %c0_28 = arith.constant 0 : index
    %32 = vector.load %arg8[%c2_26, %c0_27, %c0_28] : memref<3x1x128xf32, #tpu.memory_space<vmem>>, vector<1x1x128xf32>
    %33 = vector.shape_cast %32 : vector<1x1x128xf32> to vector<1x128xf32>
    %34 = vector.broadcast %33 : vector<1x128xf32> to vector<4x128xf32>
    %35 = arith.mulf %31, %34 : vector<4x128xf32>
    %c20 = arith.constant 20 : index
    %c0_29 = arith.constant 0 : index
    %36 = vector.load %arg12[%c20, %c0_29] : memref<24x128xf32, #tpu.memory_space<vmem>>, vector<4x128xf32>
    tpu.vector_store %arg12[%c20, %c0_29], %35 {strides = array<i32>} : memref<24x128xf32, #tpu.memory_space<vmem>>, vector<4x128xf32>,
    %c0_30 = arith.constant 0 : index
    %c0_31 = arith.constant 0 : index
    %37 = vector.load %arg4[%c0_30, %c0_31] : memref<16x24xf32, #tpu.memory_space<vmem>>, vector<16x24xf32>
    %c0_32 = arith.constant 0 : index
    %c0_33 = arith.constant 0 : index
    %38 = vector.load %arg12[%c0_32, %c0_33] : memref<24x128xf32, #tpu.memory_space<vmem>>, vector<24x128xf32>
    %cst = arith.constant dense<0.000000e+00> : vector<16x128xf32>
    %39 = tpu.matmul %37, %38, %cst {dimension_numbers = #tpu.dot_dimension_numbers<[1], [0], [0], [1], [0, 0, 1, 1], [], []>} : vector<16x24xf32>, vector<24x128xf32>, vector<16x128xf32> -> vector<16x128xf32>
    %c0_34 = arith.constant 0 : index
    %c0_35 = arith.constant 0 : index
    %40 = vector.load %arg5[%c0_34, %c0_35] : memref<16x1xf32, #tpu.memory_space<vmem>>, vector<16x1xf32>
    %41 = vector.broadcast %40 : vector<16x1xf32> to vector<16x128xf32>
    %42 = arith.addf %39, %41 : vector<16x128xf32>
    %cst_36 = arith.constant 0.000000e+00 : f32
    %43 = vector.broadcast %cst_36 : f32 to vector<16x128xf32>
    %44 = arith.maximumf %42, %43 : vector<16x128xf32>
    %c0_37 = arith.constant 0 : index
    %c0_38 = arith.constant 0 : index
    %45 = vector.load %arg6[%c0_37, %c0_38] : memref<8x16xf32, #tpu.memory_space<vmem>>, vector<4x16xf32>
    %cst_39 = arith.constant dense<0.000000e+00> : vector<4x128xf32>
    %46 = tpu.matmul %45, %44, %cst_39 {dimension_numbers = #tpu.dot_dimension_numbers<[1], [0], [0], [1], [0, 0, 1, 1], [], []>} : vector<4x16xf32>, vector<16x128xf32>, vector<4x128xf32> -> vector<4x128xf32>
    %c0_40 = arith.constant 0 : index
    %c0_41 = arith.constant 0 : index
    %47 = vector.load %arg7[%c0_40, %c0_41] : memref<8x1xf32, #tpu.memory_space<vmem>>, vector<4x1xf32>
    %48 = vector.broadcast %47 : vector<4x1xf32> to vector<4x128xf32>
    %49 = arith.addf %46, %48 : vector<4x128xf32>
    %c4_42 = arith.constant 4 : index
    %c0_43 = arith.constant 0 : index
    %50 = vector.load %arg6[%c4_42, %c0_43] : memref<8x16xf32, #tpu.memory_space<vmem>>, vector<4x16xf32>
    %cst_44 = arith.constant dense<0.000000e+00> : vector<4x128xf32>
    %51 = tpu.matmul %50, %44, %cst_44 {dimension_numbers = #tpu.dot_dimension_numbers<[1], [0], [0], [1], [0, 0, 1, 1], [], []>} : vector<4x16xf32>, vector<16x128xf32>, vector<4x128xf32> -> vector<4x128xf32>
    %c4_45 = arith.constant 4 : index
    %c0_46 = arith.constant 0 : index
    %52 = vector.load %arg7[%c4_45, %c0_46] : memref<8x1xf32, #tpu.memory_space<vmem>>, vector<4x1xf32>
    %53 = vector.broadcast %52 : vector<4x1xf32> to vector<4x128xf32>
    %54 = arith.addf %51, %53 : vector<4x128xf32>
    %cst_47 = arith.constant 2.000000e+00 : f32
    %55 = vector.broadcast %cst_47 : f32 to vector<4x128xf32>
    %56 = arith.addf %54, %55 : vector<4x128xf32>
    %57 = math.absf %56 : vector<4x128xf32>
    %cst_48 = arith.constant 0.000000e+00 : f32
    %58 = vector.broadcast %cst_48 : f32 to vector<4x128xf32>
    %59 = arith.subf %58, %57 : vector<4x128xf32>
    %60 = math.exp %59 : vector<4x128xf32>
    %cst_49 = arith.constant 1.000000e+00 : f32
    %61 = vector.broadcast %cst_49 : f32 to vector<4x128xf32>
    %62 = arith.addf %61, %60 : vector<4x128xf32>
    %63 = tpu.reciprocal %62 {approx = true} : vector<4x128xf32> -> vector<4x128xf32>
    %cst_50 = arith.constant 0.000000e+00 : f32
    %64 = vector.broadcast %cst_50 : f32 to vector<4x128xf32>
    %65 = arith.cmpf oge, %56, %64 : vector<4x128xf32>
    %66 = arith.mulf %60, %63 : vector<4x128xf32>
    %67 = arith.select %65, %63, %66 : vector<4x128xi1>, vector<4x128xf32>
    %cst_51 = arith.constant 0.000000e+00 : f32
    %68 = vector.broadcast %cst_51 : f32 to vector<4x128xf32>
    %69 = arith.minimumf %56, %68 : vector<4x128xf32>
    %70 = math.log %62 : vector<4x128xf32>
    %71 = arith.subf %69, %70 : vector<4x128xf32>
    %72 = arith.mulf %67, %1 : vector<4x128xf32>
    %73 = arith.addf %72, %49 : vector<4x128xf32>
    %c0_52 = arith.constant 0 : index
    %c0_53 = arith.constant 0 : index
    %c0_54 = arith.constant 0 : index
    %74 = vector.load %arg9[%c0_52, %c0_53, %c0_54] : memref<1x4x128xf32, #tpu.memory_space<vmem>>, vector<1x4x128xf32>
    %75 = vector.shape_cast %74 : vector<1x4x128xf32> to vector<4x128xf32>
    %76 = vector.shape_cast %73 : vector<4x128xf32> to vector<1x4x128xf32>
    tpu.vector_store %arg9[%c0_52, %c0_53, %c0_54], %76 {strides = array<i32>} : memref<1x4x128xf32, #tpu.memory_space<vmem>>, vector<1x4x128xf32>,
    %77 = vector.shape_cast %71 : vector<4x128xf32> to vector<1x4x128xf32>
    %cst_55 = arith.constant dense<0.000000e+00> : vector<1xf32>
    %78 = vector.multi_reduction <add>, %77, %cst_55 [1, 2] : vector<1x4x128xf32> to vector<1xf32>
    %79 = vector.shape_cast %78 : vector<1xf32> to vector<1x1x1xf32>
    %80 = vector.extract %79[0, 0, 0] : f32 from vector<1x1x1xf32>
    %81 = vector.broadcast %80 : f32 to vector<1x1x1x1xf32>
    %c0_56 = arith.constant 0 : index
    %c0_57 = arith.constant 0 : index
    %c0_58 = arith.constant 0 : index
    %c0_59 = arith.constant 0 : index
    %82 = vector.load %arg10[%c0_56, %c0_57, %c0_58, %c0_59] : memref<1x1x1x1xf32, #tpu.memory_space<vmem>>, vector<1x1x1x1xf32>
    tpu.vector_store %arg10[%c0_56, %c0_57, %c0_58, %c0_59], %81 {strides = array<i32>} : memref<1x1x1x1xf32, #tpu.memory_space<vmem>>, vector<1x1x1x1xf32>,
    return
  }
  func.func @transform_0(%arg0: i32, %arg1: i32) -> (i32, i32, i32) {
    %c0_i32 = arith.constant 0 : i32
    %c0_i32_0 = arith.constant 0 : i32
    return %arg0, %c0_i32, %arg1 : i32, i32, i32
  }
  func.func @transform_1(%arg0: i32, %arg1: i32) -> (i32, i32, i32) {
    %c1_i32 = arith.constant 1 : i32
    %0 = arith.muli %arg1, %c1_i32 : i32
    %c1_i32_0 = arith.constant 1 : i32
    %1 = arith.subi %0, %c1_i32_0 : i32
    %c0_i32 = arith.constant 0 : i32
    %2 = arith.maxsi %1, %c0_i32 : i32
    %c0_i32_1 = arith.constant 0 : i32
    %c0_i32_2 = arith.constant 0 : i32
    return %arg0, %c0_i32_1, %2 : i32, i32, i32
  }
  func.func @transform_2(%arg0: i32, %arg1: i32) -> (i32, i32) {
    %c0_i32 = arith.constant 0 : i32
    %c0_i32_0 = arith.constant 0 : i32
    %c0_i32_1 = arith.constant 0 : i32
    return %c0_i32, %c0_i32_0 : i32, i32
  }
  func.func @transform_3(%arg0: i32, %arg1: i32) -> (i32, i32) {
    %c0_i32 = arith.constant 0 : i32
    %c0_i32_0 = arith.constant 0 : i32
    %c0_i32_1 = arith.constant 0 : i32
    return %c0_i32, %c0_i32_0 : i32, i32
  }
  func.func @transform_4(%arg0: i32, %arg1: i32) -> (i32, i32) {
    %c0_i32 = arith.constant 0 : i32
    %c0_i32_0 = arith.constant 0 : i32
    %c0_i32_1 = arith.constant 0 : i32
    return %c0_i32, %c0_i32_0 : i32, i32
  }
  func.func @transform_5(%arg0: i32, %arg1: i32) -> (i32, i32) {
    %c0_i32 = arith.constant 0 : i32
    %c0_i32_0 = arith.constant 0 : i32
    %c0_i32_1 = arith.constant 0 : i32
    return %c0_i32, %c0_i32_0 : i32, i32
  }
  func.func @transform_6(%arg0: i32, %arg1: i32) -> (i32, i32, i32) {
    %c0_i32 = arith.constant 0 : i32
    %c0_i32_0 = arith.constant 0 : i32
    %c0_i32_1 = arith.constant 0 : i32
    %c0_i32_2 = arith.constant 0 : i32
    return %c0_i32, %c0_i32_0, %c0_i32_1 : i32, i32, i32
  }
  func.func @transform_7(%arg0: i32, %arg1: i32) -> (i32, i32, i32) {
    %c0_i32 = arith.constant 0 : i32
    %c0_i32_0 = arith.constant 0 : i32
    return %arg0, %c0_i32, %arg1 : i32, i32, i32
  }
  func.func @transform_8(%arg0: i32, %arg1: i32) -> (i32, i32, i32, i32) {
    %c0_i32 = arith.constant 0 : i32
    %c0_i32_0 = arith.constant 0 : i32
    %c0_i32_1 = arith.constant 0 : i32
    return %arg0, %arg1, %c0_i32, %c0_i32_0 : i32, i32, i32, i32
  }
}

</mosaic_0001>

<llo_original>
// kernel: tpu_custom_call.1
$region0: #{tpu_custom_call.1}
  #allocation0 [shape = 'u32[]', space=smem, size = 0x4, offset = 0x4, fixed_abs, tag = 'smem constant byte address 0x4 - core index']
  #allocation1 [shape = 'u32[144,128]{1,0:T(1,128)}', space=vmem, size = 0x12000, scoped, tag = 'internal scratch']
  #allocation2 [shape = 'f32[4,256]{1,0:T(4,128)}', space=vmem, size = 0x1000, scoped, tag = 'scratch operand']
  #allocation3 [shape = 'f32[24,128]{1,0:T(8,128)}', space=vmem, size = 0x3000, scoped, tag = 'scratch operand']
  %s0 = inlined_call_operand.vmem [shape: f32[2,4,256], index: 0, kind: input, shape index: {}]
  %s1 = inlined_call_operand.hbm [shape: f32[2,4,256], index: 1, kind: input, shape index: {}]
  %s2 = inlined_call_operand.vmem [shape: f32[16,24], index: 2, kind: input, shape index: {}]
  %s3 = inlined_call_operand.vmem [shape: f32[16,1], index: 3, kind: input, shape index: {}]
  %s4 = inlined_call_operand.vmem [shape: f32[8,16], index: 4, kind: input, shape index: {}]
  %s5 = inlined_call_operand.vmem [shape: f32[8,1], index: 5, kind: input, shape index: {}]
  %s6 = inlined_call_operand.vmem [shape: f32[3,1,128], index: 6, kind: input, shape index: {}]
  %s7 = inlined_call_operand.hbm [shape: f32[2,4,256], index: 7, kind: output, shape index: {0}]
  %s8 = inlined_call_operand.vmem [shape: f32[2,2,1,1], index: 8, kind: output, shape index: {1}]
  %9 = xla_tuple %s7, %s8
  %s10 = sld [smem:[#allocation0]]
  $region81: #{tpu_custom_call.1} parent=0
    _
  %s12 = ssub.s32 1, %s10
  %s13 = scalar_select 0, %s12, %s10
  $region1: #{tpu_custom_call.1} parent=0
    #allocation4 [shape = 'u8[4096]{0}', space=vmem, size = 0x1000, scoped, tag = 'input window, operand 1']
    #allocation5 [shape = 's32[2]{0}', space=sflag, size = 0x8, scoped, tag = 'scoped memory for tpu_custom_call.1']
    #allocation6 [shape = 's32[2]{0}', space=sflag, size = 0x8, scoped, tag = 'scoped memory for tpu_custom_call.1']
    #allocation7 [shape = 'u8[4096]{0}', space=vmem, size = 0x1000, scoped, tag = 'output window, operand 0']
    %14 = vsyncpa [#allocation5], 0
    %s15 = scalar_lea.sflag [#allocation5], 1
    %16 = vsyncpa %s15, 0
    %17 = vsyncpa [#allocation6], 0
    %s18 = scalar_lea.sflag [#allocation6], 1
    %19 = vsyncpa %s18, 0
    loop: start=0, step=1, limit=6
    $region2: #{tpu_custom_call.1} parent=1 // loop_pre_header
      _
    $region3: #{tpu_custom_call.1} parent=1 // loop_header
      %s21 = sphi 0, %s25
      %p22 = scmp.ge.s32.totalorder %s21, 6
      %s28 = sphi 0, %s40
      %s29 = sphi 0, %s36
      %s30 = sphi 0, %s28
      %s31 = sphi 0, %s29
      %s32 = sphi 0, %s30
      %s33 = sphi 0, %s31
      %s45 = sphi 0, %s47
      %s48 = sphi 0, %s45
      %s49 = sphi 0, %s48
      %s65 = sphi 0, %s49
      %s79 = sphi 0, %s81
      %s82 = sphi 0, %s79
      %s83 = sphi 0, %s82
      %s99 = sphi 0, %s83
      %s103 = sphi 0, %s103
      %s105 = sphi 0, %s103
      %s106 = sphi 0, %s105
      %s120 = sphi 0, %s106
      %s124 = sphi 0, %s124
      %s126 = sphi 0, %s124
      %s127 = sphi 0, %s126
      %s141 = sphi 0, %s127
      %s145 = sphi 0, %s145
      %s147 = sphi 0, %s145
      %s148 = sphi 0, %s147
      %s162 = sphi 0, %s148
      %s166 = sphi 0, %s166
      %s168 = sphi 0, %s166
      %s169 = sphi 0, %s168
      %s183 = sphi 0, %s169
      %s187 = sphi 0, %s187
      %s189 = sphi 0, %s187
      %s190 = sphi 0, %s189
      %s204 = sphi 0, %s190
      %s212 = sphi 0, %s214
      %s215 = sphi 0, %s212
      %s216 = sphi 0, %s215
      %s232 = sphi 0, %s216
      %s240 = sphi 0, %s242
      %s243 = sphi 0, %s240
      %s244 = sphi 0, %s243
      %s260 = sphi 0, %s244
    $region4: #{tpu_custom_call.1} parent=1 // loop_header_branch
      %24 = sbr.rel (%p22) target = $region8
    $region5: #{tpu_custom_call.1} parent=1 // loop_body
      %s26 = ssub.s32 %s21, 1
      %s27 = ssub.s32 %s21, 2
      %s34 = sadd.s32 1, %s29
      %p35 = scmp.ge.s32.totalorder %s34, 2
      %s36 = scalar_select %p35, 0, %s34
      %s37 = sadd.s32 1, %s28
      %s38 = scalar_select %p35, %s37, %s28
      %p39 = scmp.ge.s32.totalorder %s38, 2
      %s40 = scalar_select %p39, 0, %s38
      %s41 = ssub.s32 %s28, %s40
      %s42 = ssub.s32 %s29, %s36
      %s43 = sor.u32 %s41, %s42
      %p44 = scmp.eq.s32.totalorder %s43, 0
      %s46 = sadd.s32 %s45, 1
      %s47 = scalar_select %p44, %s45, %s46
      %p50 = pneg %p44
      %p51 = scmp.eq.s32.totalorder %s21, 3
      %p52 = por %p50, %p51
      %p53 = scmp.ne.s32.totalorder %s45, %s48
      %p54 = scmp.eq.s32.totalorder %s21, 0
      %p55 = por %p53, %p54
      %p56 = scmp.ne.s32.totalorder %s45, %s48
      %p57 = scmp.eq.s32.totalorder %s26, 3
      %p58 = por %p56, %p57
      %p59 = scmp.ne.s32.totalorder %s48, %s49
      %p60 = scmp.eq.s32.totalorder %s26, 0
      %p61 = por %p59, %p60
      %p62 = scmp.ne.s32.totalorder %s48, %s49
      %p63 = scmp.eq.s32.totalorder %s27, 3
      %p64 = por %p62, %p63
      %p66 = scmp.ne.s32.totalorder %s49, %s65
      %p67 = scmp.eq.s32.totalorder %s27, 0
      %p68 = por %p66, %p67
      %s69 = ssub.s32 %s29, 1
      %p70 = scmp.gt.s32.totalorder %s69, 0
      %s71 = scalar_select %p70, %s69, 0
      %s72 = ssub.s32 %s36, 1
      %p73 = scmp.gt.s32.totalorder %s72, 0
      %s74 = scalar_select %p73, %s72, 0
      %s75 = ssub.s32 %s28, %s40
      %s76 = ssub.s32 %s71, %s74
      %s77 = sor.u32 %s75, %s76
      %p78 = scmp.eq.s32.totalorder %s77, 0
      %s80 = sadd.s32 %s79, 1
      %s81 = scalar_select %p78, %s79, %s80
      %p84 = pneg %p78
      %p85 = scmp.eq.s32.totalorder %s21, 3
      %p86 = por %p84, %p85
      %p87 = scmp.ne.s32.totalorder %s79, %s82
      %p88 = scmp.eq.s32.totalorder %s21, 0
      %p89 = por %p87, %p88
      %p90 = scmp.ne.s32.totalorder %s79, %s82
      %p91 = scmp.eq.s32.totalorder %s26, 3
      %p92 = por %p90, %p91
      %p93 = scmp.ne.s32.totalorder %s82, %s83
      %p94 = scmp.eq.s32.totalorder %s26, 0
      %p95 = por %p93, %p94
      %p96 = scmp.ne.s32.totalorder %s82, %s83
      %p97 = scmp.eq.s32.totalorder %s27, 3
      %p98 = por %p96, %p97
      %p100 = scmp.ne.s32.totalorder %s83, %s99
      %p101 = scmp.eq.s32.totalorder %s27, 0
      %p102 = por %p100, %p101
      %s104 = sadd.s32 %s103, 1
      %p107 = scmp.eq.s32.totalorder %s21, 3
      %p108 = scmp.ne.s32.totalorder %s103, %s105
      %p109 = scmp.eq.s32.totalorder %s21, 0
      %p110 = por %p108, %p109
      %p111 = scmp.ne.s32.totalorder %s103, %s105
      %p112 = scmp.eq.s32.totalorder %s26, 3
      %p113 = por %p111, %p112
      %p114 = scmp.ne.s32.totalorder %s105, %s106
      %p115 = scmp.eq.s32.totalorder %s26, 0
      %p116 = por %p114, %p115
      %p117 = scmp.ne.s32.totalorder %s105, %s106
      %p118 = scmp.eq.s32.totalorder %s27, 3
      %p119 = por %p117, %p118
      %p121 = scmp.ne.s32.totalorder %s106, %s120
      %p122 = scmp.eq.s32.totalorder %s27, 0
      %p123 = por %p121, %p122
      %s125 = sadd.s32 %s124, 1
      %p128 = scmp.eq.s32.totalorder %s21, 3
      %p129 = scmp.ne.s32.totalorder %s124, %s126
      %p130 = scmp.eq.s32.totalorder %s21, 0
      %p131 = por %p129, %p130
      %p132 = scmp.ne.s32.totalorder %s124, %s126
      %p133 = scmp.eq.s32.totalorder %s26, 3
      %p134 = por %p132, %p133
      %p135 = scmp.ne.s32.totalorder %s126, %s127
      %p136 = scmp.eq.s32.totalorder %s26, 0
      %p137 = por %p135, %p136
      %p138 = scmp.ne.s32.totalorder %s126, %s127
      %p139 = scmp.eq.s32.totalorder %s27, 3
      %p140 = por %p138, %p139
      %p142 = scmp.ne.s32.totalorder %s127, %s141
      %p143 = scmp.eq.s32.totalorder %s27, 0
      %p144 = por %p142, %p143
      %s146 = sadd.s32 %s145, 1
      %p149 = scmp.eq.s32.totalorder %s21, 3
      %p150 = scmp.ne.s32.totalorder %s145, %s147
      %p151 = scmp.eq.s32.totalorder %s21, 0
      %p152 = por %p150, %p151
      %p153 = scmp.ne.s32.totalorder %s145, %s147
      %p154 = scmp.eq.s32.totalorder %s26, 3
      %p155 = por %p153, %p154
      %p156 = scmp.ne.s32.totalorder %s147, %s148
      %p157 = scmp.eq.s32.totalorder %s26, 0
      %p158 = por %p156, %p157
      %p159 = scmp.ne.s32.totalorder %s147, %s148
      %p160 = scmp.eq.s32.totalorder %s27, 3
      %p161 = por %p159, %p160
      %p163 = scmp.ne.s32.totalorder %s148, %s162
      %p164 = scmp.eq.s32.totalorder %s27, 0
      %p165 = por %p163, %p164
      %s167 = sadd.s32 %s166, 1
      %p170 = scmp.eq.s32.totalorder %s21, 3
      %p171 = scmp.ne.s32.totalorder %s166, %s168
      %p172 = scmp.eq.s32.totalorder %s21, 0
      %p173 = por %p171, %p172
      %p174 = scmp.ne.s32.totalorder %s166, %s168
      %p175 = scmp.eq.s32.totalorder %s26, 3
      %p176 = por %p174, %p175
      %p177 = scmp.ne.s32.totalorder %s168, %s169
      %p178 = scmp.eq.s32.totalorder %s26, 0
      %p179 = por %p177, %p178
      %p180 = scmp.ne.s32.totalorder %s168, %s169
      %p181 = scmp.eq.s32.totalorder %s27, 3
      %p182 = por %p180, %p181
      %p184 = scmp.ne.s32.totalorder %s169, %s183
      %p185 = scmp.eq.s32.totalorder %s27, 0
      %p186 = por %p184, %p185
      %s188 = sadd.s32 %s187, 1
      %p191 = scmp.eq.s32.totalorder %s21, 3
      %p192 = scmp.ne.s32.totalorder %s187, %s189
      %p193 = scmp.eq.s32.totalorder %s21, 0
      %p194 = por %p192, %p193
      %p195 = scmp.ne.s32.totalorder %s187, %s189
      %p196 = scmp.eq.s32.totalorder %s26, 3
      %p197 = por %p195, %p196
      %p198 = scmp.ne.s32.totalorder %s189, %s190
      %p199 = scmp.eq.s32.totalorder %s26, 0
      %p200 = por %p198, %p199
      %p201 = scmp.ne.s32.totalorder %s189, %s190
      %p202 = scmp.eq.s32.totalorder %s27, 3
      %p203 = por %p201, %p202
      %p205 = scmp.ne.s32.totalorder %s190, %s204
      %p206 = scmp.eq.s32.totalorder %s27, 0
      %p207 = por %p205, %p206
      %s208 = ssub.s32 %s28, %s40
      %s209 = ssub.s32 %s29, %s36
      %s210 = sor.u32 %s208, %s209
      %p211 = scmp.eq.s32.totalorder %s210, 0
      %s213 = sadd.s32 %s212, 1
      %s214 = scalar_select %p211, %s212, %s213
      %p217 = pneg %p211
      %p218 = scmp.eq.s32.totalorder %s21, 3
      %p219 = por %p217, %p218
      %p220 = scmp.ne.s32.totalorder %s212, %s215
      %p221 = scmp.eq.s32.totalorder %s21, 0
      %p222 = por %p220, %p221
      %p223 = scmp.ne.s32.totalorder %s212, %s215
      %p224 = scmp.eq.s32.totalorder %s26, 3
      %p225 = por %p223, %p224
      %p226 = scmp.ne.s32.totalorder %s215, %s216
      %p227 = scmp.eq.s32.totalorder %s26, 0
      %p228 = por %p226, %p227
      %p229 = scmp.ne.s32.totalorder %s215, %s216
      %p230 = scmp.eq.s32.totalorder %s27, 3
      %p231 = por %p229, %p230
      %p233 = scmp.ne.s32.totalorder %s216, %s232
      %p234 = scmp.eq.s32.totalorder %s27, 0
      %p235 = por %p233, %p234
      %s236 = ssub.s32 %s28, %s40
      %s237 = ssub.s32 %s29, %s36
      %s238 = sor.u32 %s236, %s237
      %p239 = scmp.eq.s32.totalorder %s238, 0
      %s241 = sadd.s32 %s240, 1
      %s242 = scalar_select %p239, %s240, %s241
      %p245 = pneg %p239
      %p246 = scmp.eq.s32.totalorder %s21, 3
      %p247 = por %p245, %p246
      %p248 = scmp.ne.s32.totalorder %s240, %s243
      %p249 = scmp.eq.s32.totalorder %s21, 0
      %p250 = por %p248, %p249
      %p251 = scmp.ne.s32.totalorder %s240, %s243
      %p252 = scmp.eq.s32.totalorder %s26, 3
      %p253 = por %p251, %p252
      %p254 = scmp.ne.s32.totalorder %s243, %s244
      %p255 = scmp.eq.s32.totalorder %s26, 0
      %p256 = por %p254, %p255
      %p257 = scmp.ne.s32.totalorder %s243, %s244
      %p258 = scmp.eq.s32.totalorder %s27, 3
      %p259 = por %p257, %p258
      %p261 = scmp.ne.s32.totalorder %s244, %s260
      %p262 = scmp.eq.s32.totalorder %s27, 0
      %p263 = por %p261, %p262
      %p264 = scmp.le.s32.totalorder 1, %s21
      %p265 = scmp.lt.s32.totalorder %s21, 5
      %p266 = pnand %p264, %p265
      %p267 = pneg %p266
      // Predicated region
      $region9: #{tpu_custom_call.1} parent=5 // pred_check
        _
      $region10: #{tpu_custom_call.1} parent=5 // pred_check_branch
        %269 = sbr.rel (%p266) target = $region12
      $region11: #{tpu_custom_call.1} parent=5 // pred_region
        %s270 = ssub.s32 %s21, 1
        // Predicated region
        $region13: #{tpu_custom_call.1} parent=11 // pred_check
          %p271 = pneg %p116
        $region14: #{tpu_custom_call.1} parent=11 // pred_check_branch
          %273 = sbr.rel (%p271) target = $region16
        $region15: #{tpu_custom_call.1} parent=11 // pred_region
          _
        $region16: #{tpu_custom_call.1} parent=11 // pred_fallthru
          _
        // Predicated region
        $region17: #{tpu_custom_call.1} parent=11 // pred_check
          %p274 = pneg %p137
        $region18: #{tpu_custom_call.1} parent=11 // pred_check_branch
          %276 = sbr.rel (%p274) target = $region20
        $region19: #{tpu_custom_call.1} parent=11 // pred_region
          _
        $region20: #{tpu_custom_call.1} parent=11 // pred_fallthru
          _
        // Predicated region
        $region21: #{tpu_custom_call.1} parent=11 // pred_check
          %p277 = pneg %p158
        $region22: #{tpu_custom_call.1} parent=11 // pred_check_branch
          %279 = sbr.rel (%p277) target = $region24
        $region23: #{tpu_custom_call.1} parent=11 // pred_region
          _
        $region24: #{tpu_custom_call.1} parent=11 // pred_fallthru
          _
        // Predicated region
        $region25: #{tpu_custom_call.1} parent=11 // pred_check
          %p280 = pneg %p179
        $region26: #{tpu_custom_call.1} parent=11 // pred_check_branch
          %282 = sbr.rel (%p280) target = $region28
        $region27: #{tpu_custom_call.1} parent=11 // pred_region
          _
        $region28: #{tpu_custom_call.1} parent=11 // pred_fallthru
          _
        // Predicated region
        $region29: #{tpu_custom_call.1} parent=11 // pred_check
          %p283 = pneg %p200
        $region30: #{tpu_custom_call.1} parent=11 // pred_check_branch
          %285 = sbr.rel (%p283) target = $region32
        $region31: #{tpu_custom_call.1} parent=11 // pred_region
          _
        $region32: #{tpu_custom_call.1} parent=11 // pred_fallthru
          _
      $region12: #{tpu_custom_call.1} parent=5 // pred_fallthru
        _
      %p286 = scmp.lt.s32.totalorder %s21, 4
      // Predicated region
      $region33: #{tpu_custom_call.1} parent=5 // pred_check
        %p287 = pneg %p286
      $region34: #{tpu_custom_call.1} parent=5 // pred_check_branch
        %289 = sbr.rel (%p287) target = $region36
      $region35: #{tpu_custom_call.1} parent=5 // pred_region
        // Predicated region
        $region37: #{tpu_custom_call.1} parent=35 // pred_check
          %p290 = pneg %p55
        $region38: #{tpu_custom_call.1} parent=35 // pred_check_branch
          %292 = sbr.rel (%p290) target = $region40
        $region39: #{tpu_custom_call.1} parent=35 // pred_region
          %p293 = scmp.lt.s32.totalorder %s28, 1
          %s294 = scalar_select %p293, %s28, 1
          %p295 = scmp.lt.s32.totalorder %s29, 1
          %s296 = scalar_select %p295, %s29, 1
          %s297 = smul.addr %s294, 2
          %s298 = sadd.s32 %s296, %s297
          %s299 = smul.addr %s298, 4
          %s300 = scalar_lea.vmem %s0, %s299
        $region40: #{tpu_custom_call.1} parent=35 // pred_fallthru
          _
        // Predicated region
        $region41: #{tpu_custom_call.1} parent=35 // pred_check
          %p301 = pneg %p89
        $region42: #{tpu_custom_call.1} parent=35 // pred_check_branch
          %303 = sbr.rel (%p301) target = $region44
        $region43: #{tpu_custom_call.1} parent=35 // pred_region
          %s304 = sand.u32 %s79, 1
          %s305 = scalar_lea.sflag [#allocation5], %s304
          %s306 = sand.u32 %s79, 1
          %s307 = smul.addr %s306, 4
          %s308 = scalar_lea.vmem [#allocation4], %s307
          %s309 = ssub.s32 %s29, 1
          %p310 = scmp.gt.s32.totalorder %s309, 0
          %s311 = scalar_select %p310, %s309, 0
          %s313 = ssub.s32 64, 64
          %314 = vsyncadd %s305, %s313
          %s315 = smul.addr %s28, 2
          %s316 = sadd.s32 %s311, %s315
          %s317 = smul.addr %s316, 64
          %s318 = scalar_lea.hbm %s1, %s317
          %s320 = sshll.u32 %s308, 4
          %s321 = int_to_ptr.vmem [resolvable:$true] %s320
          %323 = dma.hbm_to_vmem [thread:$0]  %s318, 64, %s321, %s305
        $region44: #{tpu_custom_call.1} parent=35 // pred_fallthru
          _
      $region36: #{tpu_custom_call.1} parent=5 // pred_fallthru
        _
      %p324 = scmp.le.s32.totalorder 1, %s21
      %p325 = scmp.lt.s32.totalorder %s21, 5
      %p326 = pnand %p324, %p325
      %p327 = pneg %p326
      // Predicated region
      $region45: #{tpu_custom_call.1} parent=5 // pred_check
        _
      $region46: #{tpu_custom_call.1} parent=5 // pred_check_branch
        %329 = sbr.rel (%p326) target = $region48
      $region47: #{tpu_custom_call.1} parent=5 // pred_region
        %s330 = ssub.s32 %s21, 1
        %s331 = sand.u32 %s82, 1
        %s332 = scalar_lea.sflag [#allocation5], %s331
        %s333 = sand.u32 %s82, 1
        %s334 = smul.addr %s333, 4
        %s335 = scalar_lea.vmem [#allocation4], %s334
        // Predicated region
        $region49: #{tpu_custom_call.1} parent=47 // pred_check
          %p336 = pneg %p95
        $region50: #{tpu_custom_call.1} parent=47 // pred_check_branch
          %338 = sbr.rel (%p336) target = $region52
        $region51: #{tpu_custom_call.1} parent=47 // pred_region
          %339 = dma.done %s332, 64
        $region52: #{tpu_custom_call.1} parent=47 // pred_fallthru
          _
        %p340 = scmp.lt.s32.totalorder %s30, 1
        %s341 = scalar_select %p340, %s30, 1
        %p342 = scmp.lt.s32.totalorder %s31, 1
        %s343 = scalar_select %p342, %s31, 1
        %s344 = smul.addr %s341, 2
        %s345 = sadd.s32 %s343, %s344
        %s346 = smul.addr %s345, 4
        %s347 = scalar_lea.vmem %s0, %s346
        %p348 = pneg %p61
        %p349 = pneg %p58
        %s350 = sand.u32 %s82, 1
        %s351 = scalar_lea.sflag [#allocation5], %s350
        %s352 = sand.u32 %s82, 1
        %s353 = smul.addr %s352, 4
        %s354 = scalar_lea.vmem [#allocation4], %s353
        %p355 = pneg %p95
        %p356 = pneg %p92
        %p357 = pneg %p116
        %p358 = pneg %p113
        %p359 = pneg %p137
        %p360 = pneg %p134
        %p361 = pneg %p158
        %p362 = pneg %p155
        %p363 = pneg %p179
        %p364 = pneg %p176
        %p365 = pneg %p200
        %p366 = pneg %p197
        %p367 = pneg %p228
        %p368 = pneg %p225
        %s369 = sand.u32 %s215, 1
        %s370 = scalar_lea.sflag [#allocation6], %s369
        %s371 = sand.u32 %s215, 1
        %s372 = smul.addr %s371, 4
        %s373 = scalar_lea.vmem [#allocation7], %s372
        %p374 = pneg %p256
        %p375 = pneg %p253
        %p376 = scmp.lt.s32.totalorder %s30, 1
        %s377 = scalar_select %p376, %s30, 1
        %p378 = scmp.lt.s32.totalorder %s31, 1
        %s379 = scalar_select %p378, %s31, 1
        %s380 = smul.addr %s377, 2
        %s381 = sadd.s32 %s379, %s380
        %s382 = scalar_lea.vmem %s8, %s381
        %p383 = scmp.lt.s32.totalorder %s30, 1
        %s384 = scalar_select %p383, %s30, 1
        %p385 = scmp.lt.s32.totalorder %s31, 1
        %s386 = scalar_select %p385, %s31, 1
        %s387 = smul.addr %s384, 2
        %s388 = sadd.s32 %s386, %s387
        %s389 = smul.addr %s388, 4
        %s390 = scalar_lea.vmem %s0, %s389
        %s391 = ssub.s32 %s31, 1
        %p392 = scmp.gt.s32.totalorder %s391, 0
        %s393 = scalar_select %p392, %s391, 0
        %p394 = scmp.lt.s32.totalorder %s30, 1
        %s395 = scalar_select %p394, %s30, 1
        %p396 = scmp.lt.s32.totalorder %s31, 1
        %s397 = scalar_select %p396, %s31, 1
        %s398 = smul.addr %s395, 2
        %s399 = sadd.s32 %s397, %s398
        %s400 = scalar_lea.vmem %s8, %s399
        %v401 = vld [vmem:[%s390] sm:$0xf]
        %p402 = scmp.eq.s32.totalorder %s31, 0
        // Predicated region
        $region53: #{tpu_custom_call.1} parent=47 // pred_check
          %p403 = pneg %p402
        $region54: #{tpu_custom_call.1} parent=47 // pred_check_branch
          %405 = sbr.rel (%p403) target = $region56
        $region55: #{tpu_custom_call.1} parent=47 // pred_region
          %406 = vst [vmem:[#allocation2] sm:$0xf] 0.0
        $region56: #{tpu_custom_call.1} parent=47 // pred_fallthru
          _
        %p407 = scmp.gt.s32.totalorder %s31, 0
        // Predicated region
        $region57: #{tpu_custom_call.1} parent=47 // pred_check
          %p408 = pneg %p407
        $region58: #{tpu_custom_call.1} parent=47 // pred_check_branch
          %410 = sbr.rel (%p408) target = $region60
        $region59: #{tpu_custom_call.1} parent=47 // pred_region
          %v411 = vld [vmem:[%s335] sm:$0xf]
          %412 = vst [vmem:[#allocation2] sm:$0xf] %v411
        $region60: #{tpu_custom_call.1} parent=47 // pred_fallthru
          _
        %413 = vst [vmem:[#allocation2 + $0x4] sm:$0xf] %v401
        %v414 = vld [vmem:[#allocation2] sm:$0xff]
        %v415 = vld [vmem:[%s6] sm:$0x1]
        %v417 = vlaneseq
        %v418 = vshrl.u32 %v417, 7
        %v419 = vsub.s32 0, %v418
        %v420 = vrot.slane %v415, %v419
        %421 = vrot.lane.b32.xlu0 %v420, 95
        %v422 = vpop.permute.xlu0 %421
        %v423 = vrot.slane %v422, 4
        %vm424 = vcmask 777216
        %v425 = vsel %vm424, %v423, %v422
        %v427 = vmul.f32 %v414, %v425
        %v429 = vcombine.high %v427, %v427
        %430 = vrot.lane.b32.xlu0 %v427, 33
        %v431 = vpop.permute.xlu0 %430
        %432 = vrot.lane.b32.xlu0 %v429, 33
        %v433 = vpop.permute.xlu0 %432
        %vm434 = vcmask 269312
        %v435 = vsel %vm434, %v431, %v433
        %437 = vst [vmem:[#allocation3] sm:$0xf] %v435
        %v438 = vld [vmem:[#allocation2] sm:$0xff]
        %v440 = vcombine.high %v438, %v438
        %441 = vrot.lane.b32.xlu0 %v438, 32
        %v442 = vpop.permute.xlu0 %441
        %443 = vrot.lane.b32.xlu0 %v440, 32
        %v444 = vpop.permute.xlu0 %443
        %vm445 = vcmask 261120
        %v446 = vsel %vm445, %v442, %v444
        %448 = vst [vmem:[#allocation3 + $0x4] sm:$0xf] %v446
        %v449 = vld [vmem:[#allocation2] sm:$0xff]
        %s450 = scalar_lea.vmem %s6, 2
        %v451 = vld [vmem:[%s450] sm:$0x1]
        %v453 = vlaneseq
        %v454 = vshrl.u32 %v453, 7
        %v455 = vsub.s32 0, %v454
        %v456 = vrot.slane %v451, %v455
        %457 = vrot.lane.b32.xlu0 %v456, 97
        %v458 = vpop.permute.xlu0 %457
        %v459 = vrot.slane %v458, 4
        %vm460 = vcmask 793600
        %v461 = vsel %vm460, %v459, %v458
        %v463 = vmul.f32 %v449, %v461
        %v465 = vcombine.high %v463, %v463
        %466 = vrot.lane.b32.xlu0 %v463, 31
        %v467 = vpop.permute.xlu0 %466
        %468 = vrot.lane.b32.xlu0 %v465, 31
        %v469 = vpop.permute.xlu0 %468
        %vm470 = vcmask 252928
        %v471 = vsel %vm470, %v467, %v469
        %473 = vst [vmem:[#allocation3 + $0x8] sm:$0xf] %v471
        %v474 = vld [vmem:[#allocation2] sm:$0xff]
        %v475 = vld [vmem:[%s6] sm:$0x1]
        %v477 = vlaneseq
        %v478 = vshrl.u32 %v477, 7
        %v479 = vsub.s32 0, %v478
        %v480 = vrot.slane %v475, %v479
        %481 = vrot.lane.b32.xlu0 %v480, 111
        %v482 = vpop.permute.xlu0 %481
        %v483 = vrot.slane %v482, 4
        %vm484 = vcmask 908288
        %v485 = vsel %vm484, %v483, %v482
        %v487 = vmul.f32 %v474, %v485
        %v489 = vcombine.high %v487, %v487
        %490 = vrot.lane.b32.xlu0 %v487, 17
        %v491 = vpop.permute.xlu0 %490
        %492 = vrot.lane.b32.xlu0 %v489, 17
        %v493 = vpop.permute.xlu0 %492
        %vm494 = vcmask 138240
        %v495 = vsel %vm494, %v491, %v493
        %497 = vst [vmem:[#allocation3 + $0xc] sm:$0xf] %v495
        %v498 = vld [vmem:[#allocation2] sm:$0xff]
        %v500 = vcombine.high %v498, %v498
        %501 = vrot.lane.b32.xlu0 %v498, 16
        %v502 = vpop.permute.xlu0 %501
        %503 = vrot.lane.b32.xlu0 %v500, 16
        %v504 = vpop.permute.xlu0 %503
        %vm505 = vcmask 130048
        %v506 = vsel %vm505, %v502, %v504
        %508 = vst [vmem:[#allocation3 + $0x10] sm:$0xf] %v506
        %v509 = vld [vmem:[#allocation2] sm:$0xff]
        %v510 = vld [vmem:[%s450] sm:$0x1]
        %v512 = vlaneseq
        %v513 = vshrl.u32 %v512, 7
        %v514 = vsub.s32 0, %v513
        %v515 = vrot.slane %v510, %v514
        %516 = vrot.lane.b32.xlu0 %v515, 113
        %v517 = vpop.permute.xlu0 %516
        %v518 = vrot.slane %v517, 4
        %vm519 = vcmask 924672
        %v520 = vsel %vm519, %v518, %v517
        %v522 = vmul.f32 %v509, %v520
        %v524 = vcombine.high %v522, %v522
        %525 = vrot.lane.b32.xlu0 %v522, 15
        %v526 = vpop.permute.xlu0 %525
        %527 = vrot.lane.b32.xlu0 %v524, 15
        %v528 = vpop.permute.xlu0 %527
        %vm529 = vcmask 121856
        %v530 = vsel %vm529, %v526, %v528
        %532 = vst [vmem:[#allocation3 + $0x14] sm:$0xf] %v530
        %v533 = vld [vmem:[%s2] sm:$0xff]
        %v534 = vld [vmem:[%s2 + $0x8] sm:$0xff]
        %v535 = vld [vmem:[#allocation3] sm:$0xff]
        %v536 = vld [vmem:[#allocation3 + $0x8] sm:$0xff]
        %v537 = vld [vmem:[#allocation3 + $0x10] sm:$0xff]
        %v538 = vld [vmem:[%s3] sm:$0xff]
        %v539 = vld [vmem:[%s3 + $0x8] sm:$0xff]
        %541 = vset.pattern.permute.xlu0 0
        %542 = vperm.xlu0 %541, %v538
        %v543 = vpop.permute.xlu0 %542
        %546 = vset.pattern.permute.xlu0 0
        %547 = vperm.xlu0 %546, %v539
        %v548 = vpop.permute.xlu0 %547
        %vm550 = vcmask 195584
        %v552 = vsel %vm550, %v533, 0
        %v555 = vsel %vm550, %v534, 0
        %557 = vmatprep.subr.mxu0 0.0
        %558 = vmatpush1.msra.mxu0 %v535
        %559 = vmatprep.subr.mxu0 0.0
        %560 = vmatpush1.msra.mxu0 %v536
        %561 = vmatprep.subr.mxu0 0.0
        %562 = vmatpush1.msra.mxu0 %v537
        %563 = vmatprep.subr.mxu0 0.0
        %564 = vmatpush1.msra.mxu0 0.0
        %565 = vmatprep.subr.mxu0 0.0
        %566 = vmatpush1.msra.mxu0 0.0
        %567 = vmatprep.subr.mxu0 0.0
        %568 = vmatpush1.msra.mxu0 0.0
        %569 = vmatprep.subr.mxu0 0.0
        %570 = vmatpush1.msra.mxu0 0.0
        %571 = vmatprep.subr.mxu0 0.0
        %572 = vmatpush1.msra.mxu0 0.0
        %573 = vmatprep.subr.mxu0 0.0
        %574 = vmatpush1.msra.mxu0 0.0
        %575 = vmatprep.subr.mxu0 0.0
        %576 = vmatpush1.msra.mxu0 0.0
        %577 = vmatprep.subr.mxu0 0.0
        %578 = vmatpush1.msra.mxu0 0.0
        %579 = vmatprep.subr.mxu0 0.0
        %580 = vmatpush1.msra.mxu0 0.0
        %581 = vmatprep.subr.mxu0 0.0
        %582 = vmatpush1.msra.mxu0 0.0
        %583 = vmatprep.subr.mxu0 0.0
        %584 = vmatpush1.msra.mxu0 0.0
        %585 = vmatprep.subr.mxu0 0.0
        %586 = vmatpush1.msra.mxu0 0.0
        %587 = vmatprep.subr.mxu0 0.0
        %588 = vmatpush1.msra.mxu0 0.0
        %589 = vmatprep.subr.mxu0 0.0
        %590 = vmatpush1.msra.mxu0 0.0
        %591 = vmatprep.subr.mxu0 0.0
        %592 = vmatpush1.msra.mxu0 0.0
        %593 = vmatprep.subr.mxu0 0.0
        %594 = vmatpush1.msra.mxu0 0.0
        %595 = vmatprep.subr.mxu0 0.0
        %596 = vmatpush1.msra.mxu0 0.0
        %597 = vmatprep.subr.mxu0 0.0
        %598 = vmatpush1.msra.mxu0 0.0
        %599 = vmatprep.subr.mxu0 0.0
        %600 = vmatpush1.msra.mxu0 0.0
        %601 = vmatprep.subr.mxu0 0.0
        %602 = vmatpush1.msra.mxu0 0.0
        %603 = vmatprep.subr.mxu0 0.0
        %604 = vmatpush1.msra.mxu0 0.0
        %605 = vmatprep.subr.mxu0 0.0
        %606 = vmatpush1.msra.mxu0 0.0
        %607 = vmatprep.subr.mxu0 0.0
        %608 = vmatpush1.msra.mxu0 0.0
        %609 = vmatprep.subr.mxu0 0.0
        %610 = vmatpush1.msra.mxu0 0.0
        %611 = vmatprep.subr.mxu0 0.0
        %612 = vmatpush1.msra.mxu0 0.0
        %613 = vmatprep.subr.mxu0 0.0
        %614 = vmatpush1.msra.mxu0 0.0
        %615 = vmatprep.subr.mxu0 0.0
        %616 = vmatpush1.msra.mxu0 0.0
        %617 = vmatprep.subr.mxu0 0.0
        %618 = vmatpush1.msra.mxu0 0.0
        %619 = vmatprep.subr.mxu0 0.0
        %620 = vmatpush1.msra.mxu0 0.0
        %621 = vmatprep.mubr.f32.mxu0 0.0
        %622 = vmatmul.mubr.f32.gmra.mrb[0].mxu0 %v552
        %v623 = vpop.f32.mrb[0].mxu0
        %v624 = vadd.f32 %v543, %v623
        %v625 = vpop.f32.mrb[0].mxu0
        %626 = vmatprep.mubr.f32.mxu0 0.0
        %627 = vmatmul.mubr.f32.gmra.mrb[0].mxu0 %v555
        %v628 = vpop.f32.mrb[0].mxu0
        %v629 = vadd.f32 %v548, %v628
        %v630 = vpop.f32.mrb[0].mxu0
        %631 = vdwg.mxu0
        %v632 = vmax.f32 %v624, 0.0
        %v633 = vmax.f32 %v629, 0.0
        %v634 = vld [vmem:[%s4] sm:$0xf]
        %v635 = vld [vmem:[%s5] sm:$0xf]
        %637 = vset.pattern.permute.xlu0 0
        %638 = vperm.xlu0 %637, %v635
        %v639 = vpop.permute.xlu0 %638
        %v642 = vsel %vm505, %v634, 0
        %644 = vmatprep.subr.mxu0 0.0
        %645 = vmatpush1.msra.mxu0 %v632
        %646 = vmatprep.subr.mxu0 0.0
        %647 = vmatpush1.msra.mxu0 %v633
        %648 = vmatprep.subr.mxu0 0.0
        %649 = vmatpush1.msra.mxu0 0.0
        %650 = vmatprep.subr.mxu0 0.0
        %651 = vmatpush1.msra.mxu0 0.0
        %652 = vmatprep.subr.mxu0 0.0
        %653 = vmatpush1.msra.mxu0 0.0
        %654 = vmatprep.subr.mxu0 0.0
        %655 = vmatpush1.msra.mxu0 0.0
        %656 = vmatprep.subr.mxu0 0.0
        %657 = vmatpush1.msra.mxu0 0.0
        %658 = vmatprep.subr.mxu0 0.0
        %659 = vmatpush1.msra.mxu0 0.0
        %660 = vmatprep.subr.mxu0 0.0
        %661 = vmatpush1.msra.mxu0 0.0
        %662 = vmatprep.subr.mxu0 0.0
        %663 = vmatpush1.msra.mxu0 0.0
        %664 = vmatprep.subr.mxu0 0.0
        %665 = vmatpush1.msra.mxu0 0.0
        %666 = vmatprep.subr.mxu0 0.0
        %667 = vmatpush1.msra.mxu0 0.0
        %668 = vmatprep.subr.mxu0 0.0
        %669 = vmatpush1.msra.mxu0 0.0
        %670 = vmatprep.subr.mxu0 0.0
        %671 = vmatpush1.msra.mxu0 0.0
        %672 = vmatprep.subr.mxu0 0.0
        %673 = vmatpush1.msra.mxu0 0.0
        %674 = vmatprep.subr.mxu0 0.0
        %675 = vmatpush1.msra.mxu0 0.0
        %676 = vmatprep.subr.mxu0 0.0
        %677 = vmatpush1.msra.mxu0 0.0
        %678 = vmatprep.subr.mxu0 0.0
        %679 = vmatpush1.msra.mxu0 0.0
        %680 = vmatprep.subr.mxu0 0.0
        %681 = vmatpush1.msra.mxu0 0.0
        %682 = vmatprep.subr.mxu0 0.0
        %683 = vmatpush1.msra.mxu0 0.0
        %684 = vmatprep.subr.mxu0 0.0
        %685 = vmatpush1.msra.mxu0 0.0
        %686 = vmatprep.subr.mxu0 0.0
        %687 = vmatpush1.msra.mxu0 0.0
        %688 = vmatprep.subr.mxu0 0.0
        %689 = vmatpush1.msra.mxu0 0.0
        %690 = vmatprep.subr.mxu0 0.0
        %691 = vmatpush1.msra.mxu0 0.0
        %692 = vmatprep.subr.mxu0 0.0
        %693 = vmatpush1.msra.mxu0 0.0
        %694 = vmatprep.subr.mxu0 0.0
        %695 = vmatpush1.msra.mxu0 0.0
        %696 = vmatprep.subr.mxu0 0.0
        %697 = vmatpush1.msra.mxu0 0.0
        %698 = vmatprep.subr.mxu0 0.0
        %699 = vmatpush1.msra.mxu0 0.0
        %700 = vmatprep.subr.mxu0 0.0
        %701 = vmatpush1.msra.mxu0 0.0
        %702 = vmatprep.subr.mxu0 0.0
        %703 = vmatpush1.msra.mxu0 0.0
        %704 = vmatprep.subr.mxu0 0.0
        %705 = vmatpush1.msra.mxu0 0.0
        %706 = vmatprep.subr.mxu0 0.0
        %707 = vmatpush1.msra.mxu0 0.0
        %708 = vmatprep.mubr.f32.mxu0 0.0
        %709 = vmatmul.mubr.f32.gmra.mrb[0].mxu0 %v642
        %v710 = vpop.f32.mrb[0].mxu0
        %v711 = vadd.f32 %v639, %v710
        %v712 = vpop.f32.mrb[0].mxu0
        %713 = vdwg.mxu0
        %v714 = vld [vmem:[%s4 + $0x4] sm:$0xf]
        %v715 = vld [vmem:[%s5 + $0x4] sm:$0xf]
        %717 = vset.pattern.permute.xlu0 0
        %718 = vperm.xlu0 %717, %v715
        %v719 = vpop.permute.xlu0 %718
        %v722 = vsel %vm505, %v714, 0
        %724 = vmatprep.subr.mxu0 0.0
        %725 = vmatpush1.msra.mxu0 %v632
        %726 = vmatprep.subr.mxu0 0.0
        %727 = vmatpush1.msra.mxu0 %v633
        %728 = vmatprep.subr.mxu0 0.0
        %729 = vmatpush1.msra.mxu0 0.0
        %730 = vmatprep.subr.mxu0 0.0
        %731 = vmatpush1.msra.mxu0 0.0
        %732 = vmatprep.subr.mxu0 0.0
        %733 = vmatpush1.msra.mxu0 0.0
        %734 = vmatprep.subr.mxu0 0.0
        %735 = vmatpush1.msra.mxu0 0.0
        %736 = vmatprep.subr.mxu0 0.0
        %737 = vmatpush1.msra.mxu0 0.0
        %738 = vmatprep.subr.mxu0 0.0
        %739 = vmatpush1.msra.mxu0 0.0
        %740 = vmatprep.subr.mxu0 0.0
        %741 = vmatpush1.msra.mxu0 0.0
        %742 = vmatprep.subr.mxu0 0.0
        %743 = vmatpush1.msra.mxu0 0.0
        %744 = vmatprep.subr.mxu0 0.0
        %745 = vmatpush1.msra.mxu0 0.0
        %746 = vmatprep.subr.mxu0 0.0
        %747 = vmatpush1.msra.mxu0 0.0
        %748 = vmatprep.subr.mxu0 0.0
        %749 = vmatpush1.msra.mxu0 0.0
        %750 = vmatprep.subr.mxu0 0.0
        %751 = vmatpush1.msra.mxu0 0.0
        %752 = vmatprep.subr.mxu0 0.0
        %753 = vmatpush1.msra.mxu0 0.0
        %754 = vmatprep.subr.mxu0 0.0
        %755 = vmatpush1.msra.mxu0 0.0
        %756 = vmatprep.subr.mxu0 0.0
        %757 = vmatpush1.msra.mxu0 0.0
        %758 = vmatprep.subr.mxu0 0.0
        %759 = vmatpush1.msra.mxu0 0.0
        %760 = vmatprep.subr.mxu0 0.0
        %761 = vmatpush1.msra.mxu0 0.0
        %762 = vmatprep.subr.mxu0 0.0
        %763 = vmatpush1.msra.mxu0 0.0
        %764 = vmatprep.subr.mxu0 0.0
        %765 = vmatpush1.msra.mxu0 0.0
        %766 = vmatprep.subr.mxu0 0.0
        %767 = vmatpush1.msra.mxu0 0.0
        %768 = vmatprep.subr.mxu0 0.0
        %769 = vmatpush1.msra.mxu0 0.0
        %770 = vmatprep.subr.mxu0 0.0
        %771 = vmatpush1.msra.mxu0 0.0
        %772 = vmatprep.subr.mxu0 0.0
        %773 = vmatpush1.msra.mxu0 0.0
        %774 = vmatprep.subr.mxu0 0.0
        %775 = vmatpush1.msra.mxu0 0.0
        %776 = vmatprep.subr.mxu0 0.0
        %777 = vmatpush1.msra.mxu0 0.0
        %778 = vmatprep.subr.mxu0 0.0
        %779 = vmatpush1.msra.mxu0 0.0
        %780 = vmatprep.subr.mxu0 0.0
        %781 = vmatpush1.msra.mxu0 0.0
        %782 = vmatprep.subr.mxu0 0.0
        %783 = vmatpush1.msra.mxu0 0.0
        %784 = vmatprep.subr.mxu0 0.0
        %785 = vmatpush1.msra.mxu0 0.0
        %786 = vmatprep.subr.mxu0 0.0
        %787 = vmatpush1.msra.mxu0 0.0
        %788 = vmatprep.mubr.f32.mxu0 0.0
        %789 = vmatmul.mubr.f32.gmra.mrb[0].mxu0 %v722
        %v790 = vpop.f32.mrb[0].mxu0
        %v791 = vadd.f32 %v719, %v790
        %v792 = vpop.f32.mrb[0].mxu0
        %793 = vdwg.mxu0
        %v794 = vadd.f32 %v791, 2.0
        %v795 = vand.u32 2147483647, %v794
        %v796 = vsub.f32 0.0, %v795
        %v797 = vmul.f32 %v796, 1.442695
        %v798 = vpow.pop %v797
        %v799 = vadd.f32 %v798, 1.0
        %v800 = vrcp.pop %v799
        %vm801 = vcmp.ge.f32.partialorder %v794, 0.0
        %v802 = vmul.f32 %v798, %v800
        %v803 = vsel %vm801, %v800, %v802
        %v804 = vmin.f32 %v794, 0.0
        %v805 = vlog2.pop %v799
        %v806 = vmul.f32 %v805, 0.6931472
        %v807 = vsub.f32 %v804, %v806
        %v808 = vmul.f32 %v803, %v401
        %v809 = vadd.f32 %v808, %v711
        %810 = vst [vmem:[%s373] sm:$0xf] %v809
        %vm811 = vcmask 1043456
        %v812 = vsel %vm811, %v807, 0.0
        %813 = vadd.xlane.f32.xlu0 %v812
        %v814 = vpop.xlane.xlu0 %813
        %v815 = vrot.slane %v814, 4
        %v816 = vadd.f32 %v814, %v815
        %v817 = vrot.slane %v816, 2
        %v818 = vadd.f32 %v816, %v817
        %v819 = vrot.slane %v818, 1
        %v820 = vadd.f32 %v818, %v819
        %s821 = vtos %v820
        %v822 = vstv %s821
        %vm823 = vcmask 0
        %824 = vst.msk [vmem:[%s400] sm:$0x1] %vm823, %v822
        %s825 = sand.u32 %s215, 1
        %s826 = scalar_lea.sflag [#allocation6], %s825
        %s827 = sand.u32 %s215, 1
        %s828 = smul.addr %s827, 4
        %s829 = scalar_lea.vmem [#allocation7], %s828
        %p830 = scmp.lt.s32.totalorder %s30, 1
        %s831 = scalar_select %p830, %s30, 1
        %p832 = scmp.lt.s32.totalorder %s31, 1
        %s833 = scalar_select %p832, %s31, 1
        %s834 = smul.addr %s831, 2
        %s835 = sadd.s32 %s833, %s834
        %s836 = scalar_lea.vmem %s8, %s835
        // Predicated region
        $region61: #{tpu_custom_call.1} parent=47 // pred_check
          %p837 = pneg %p225
        $region62: #{tpu_custom_call.1} parent=47 // pred_check_branch
          %839 = sbr.rel (%p837) target = $region64
        $region63: #{tpu_custom_call.1} parent=47 // pred_region
          %s841 = ssub.s32 64, 64
          %842 = vsyncadd %s826, %s841
          %s843 = smul.addr %s30, 2
          %s844 = sadd.s32 %s31, %s843
          %s845 = smul.addr %s844, 64
          %s846 = scalar_lea.hbm %s7, %s845
          %s848 = sshll.u32 %s829, 4
          %s849 = int_to_ptr.vmem [resolvable:$true] %s848
          %851 = dma.vmem_to_hbm [thread:$0]  %s849, 64, %s846, %s826
        $region64: #{tpu_custom_call.1} parent=47 // pred_fallthru
          _
        // Predicated region
        $region65: #{tpu_custom_call.1} parent=47 // pred_check
          %p852 = pneg %p253
        $region66: #{tpu_custom_call.1} parent=47 // pred_check_branch
          %854 = sbr.rel (%p852) target = $region68
        $region67: #{tpu_custom_call.1} parent=47 // pred_region
          _
        $region68: #{tpu_custom_call.1} parent=47 // pred_fallthru
          _
      $region48: #{tpu_custom_call.1} parent=5 // pred_fallthru
        _
      %p855 = scmp.le.s32.totalorder 2, %s21
      // Predicated region
      $region69: #{tpu_custom_call.1} parent=5 // pred_check
        %p856 = pneg %p855
      $region70: #{tpu_custom_call.1} parent=5 // pred_check_branch
        %858 = sbr.rel (%p856) target = $region72
      $region71: #{tpu_custom_call.1} parent=5 // pred_region
        %s859 = ssub.s32 %s21, 2
        // Predicated region
        $region73: #{tpu_custom_call.1} parent=71 // pred_check
          %p860 = pneg %p231
        $region74: #{tpu_custom_call.1} parent=71 // pred_check_branch
          %862 = sbr.rel (%p860) target = $region76
        $region75: #{tpu_custom_call.1} parent=71 // pred_region
          %s863 = sand.u32 %s216, 1
          %s864 = scalar_lea.sflag [#allocation6], %s863
          %s865 = sand.u32 %s216, 1
          %s866 = smul.addr %s865, 4
          %s867 = scalar_lea.vmem [#allocation7], %s866
          %868 = dma.done %s864, 64
        $region76: #{tpu_custom_call.1} parent=71 // pred_fallthru
          _
        // Predicated region
        $region77: #{tpu_custom_call.1} parent=71 // pred_check
          %p869 = pneg %p259
        $region78: #{tpu_custom_call.1} parent=71 // pred_check_branch
          %871 = sbr.rel (%p869) target = $region80
        $region79: #{tpu_custom_call.1} parent=71 // pred_region
          %p872 = scmp.lt.s32.totalorder %s32, 1
          %s873 = scalar_select %p872, %s32, 1
          %p874 = scmp.lt.s32.totalorder %s33, 1
          %s875 = scalar_select %p874, %s33, 1
          %s876 = smul.addr %s873, 2
          %s877 = sadd.s32 %s875, %s876
          %s878 = scalar_lea.vmem %s8, %s877
        $region80: #{tpu_custom_call.1} parent=71 // pred_fallthru
          _
      $region72: #{tpu_custom_call.1} parent=5 // pred_fallthru
        _
    $region6: #{tpu_custom_call.1} parent=1 // loop_footer
      %s25 = sadd.s32 1, %s21
    $region7: #{tpu_custom_call.1} parent=1 // loop_footer_branch
      %20 = sbr.rel target = $region3
    $region8: #{tpu_custom_call.1} parent=1 // loop_exit
      _
    %879 = vsyncpa [#allocation5], 1
    %s880 = scalar_lea.sflag [#allocation5], 1
    %881 = vsyncpa %s880, 1
    %882 = vsyncpa [#allocation6], 1
    %s883 = scalar_lea.sflag [#allocation6], 1
    %884 = vsyncpa %s883, 1

</llo_original>
